<compile_context>
chip_gen: v7x
topology: tpu7x:2x2x1
jax: 0.10.0
libtpu: 0.0.40
codegen_flags: <defaults>
</compile_context>

<pallas_src>
import jax
import jax.numpy as jnp
from jax.experimental import pallas as pl
from jax.experimental.pallas import tpu as pltpu


def _strength_predictor_kernel(x_ref, w_ref, b_ref, o_ref):
    # x_ref: (TB, F) VMEM tile; w_ref: (1, F) VMEM; b_ref: (1, 1) SMEM;
    # o_ref: (TB, 1) VMEM.
    x = x_ref[...].astype(jnp.float32)          # cast right after load (v5e-safe)
    w = w_ref[...].astype(jnp.float32)          # (1, F) broadcasts over rows
    b = b_ref[0, 0]                             # scalar bias from SMEM
    # fc3: per-row dot product via VPU multiply + XLU lane reduce (no MXU).
    logits = jnp.sum(x * w, axis=-1, keepdims=True) + b
    # tanh activation (EUP).
    o_ref[...] = jnp.tanh(logits).astype(o_ref.dtype)


def strength_predictor(img_fea: jax.Array, weight: jax.Array, bias: jax.Array,
                       *, block_rows: int = 512) -> jax.Array:
    """img_fea: (B, F) float32/bfloat16; weight: (1, F) (PyTorch layout); bias: (1,).

    Returns (B, 1) float32, identical semantics to tanh(nn.Linear(F, 1)(img_fea)).
    """
    B, F = img_fea.shape
    w_row = weight.reshape(1, F)                # natural row layout, no transpose
    b2 = bias.reshape(1, 1).astype(jnp.float32)

    # Batch tiling: full-array block for small B (exempt from the sublane rule),
    # 512-row blocks (multiple of 8) otherwise.  The tail tile (B % TB != 0) is
    # handled by Pallas' masked writeback; each output row only depends on its
    # own input row, so garbage in padded tail rows is never written back.
    tb = B if B <= block_rows else block_rows
    grid = (pl.cdiv(B, tb),)

    return pl.pallas_call(
        _strength_predictor_kernel,
        out_shape=jax.ShapeDtypeStruct((B, 1), jnp.float32),
        grid_spec=pltpu.PrefetchScalarGridSpec(
            num_scalar_prefetch=0,
            grid=grid,
            in_specs=[
                pl.BlockSpec((tb, F), lambda i: (i, 0)),                 # streamed
                pl.BlockSpec((1, F), lambda i: (0, 0)),                  # resident
                pl.BlockSpec(memory_space=pltpu.MemorySpace.SMEM),       # scalar bias
            ],
            out_specs=pl.BlockSpec((tb, 1), lambda i: (i, 0)),
        ),
        compiler_params=pltpu.CompilerParams(
            dimension_semantics=("parallel",),   # batch tiles are independent
        ),
    )(img_fea, w_row, b2)


if __name__ == "__main__":
    # Wang et al. use fea_dim = 96 (32 encoding features * 3); keep that here.
    B, FEA_DIM = 2, 96

    key = jax.random.PRNGKey(0)
    k_x, k_w, k_b = jax.random.split(key, 3)

    # Deterministic "PyTorch-like" init: U(-1/sqrt(fea_dim), +1/sqrt(fea_dim)).
    bound = 1.0 / (FEA_DIM ** 0.5)
    img_fea = jax.random.normal(k_x, (B, FEA_DIM), dtype=jnp.float32)
    weight = jax.random.uniform(k_w, (1, FEA_DIM), minval=-bound, maxval=bound,
                                dtype=jnp.float32)
    bias = jax.random.uniform(k_b, (1,), minval=-bound, maxval=bound,
                              dtype=jnp.float32)

    # Small (paper-sized) check: single full-array block path.
    out = strength_predictor(img_fea, weight, bias)
    out = jax.block_until_ready(out)
    ref = jnp.tanh(img_fea @ weight.T + bias)
    assert out.shape == (B, 1), out.shape
    assert jnp.allclose(out, ref, atol=1e-5, rtol=1e-5), (out, ref)

    # Larger batch check: exercises batch tiling + the remainder (tail) tile.
    B2 = 1030  # not a multiple of the 512-row tile
    img_fea2 = jax.random.normal(jax.random.PRNGKey(1), (B2, FEA_DIM),
                                 dtype=jnp.float32)
    out2 = jax.block_until_ready(strength_predictor(img_fea2, weight, bias))
    ref2 = jnp.tanh(img_fea2 @ weight.T + bias)
    assert out2.shape == (B2, 1), out2.shape
    assert jnp.allclose(out2, ref2, atol=1e-5, rtol=1e-5)

    print("KERNEL_OK")
</pallas_src>

<mosaic_0001>
module attributes {stable_mosaic.version = 11 : i64} {
  func.func @_strength_predictor_kernel(%arg0: i32, %arg1: memref<2x96xf32, #tpu.memory_space<vmem>>, %arg2: memref<1x96xf32, #tpu.memory_space<vmem>>, %arg3: memref<1x1xf32, #tpu.memory_space<smem>>, %arg4: memref<2x1xf32, #tpu.memory_space<vmem>>) attributes {dimension_semantics = [#tpu.dimension_semantics<parallel>], iteration_bounds = array<i64: 1>, scalar_prefetch = 0 : i64, scratch_operands = 0 : i64, tpu.core_type = #tpu.core_type<tc>, window_params = [{transform_indices = @transform_0, window_bounds = array<i64: 2, 96>}, {pipeline_mode = #tpu.pipeline_mode<synchronous>, transform_indices = @transform_1, window_bounds = array<i64: 1, 96>}, {transform_indices = @transform_2, window_bounds = array<i64: 1, 1>}, {transform_indices = @transform_3, window_bounds = array<i64: 2, 1>}]} {
    %c0 = arith.constant 0 : index
    %c0_0 = arith.constant 0 : index
    %0 = vector.load %arg1[%c0, %c0_0] : memref<2x96xf32, #tpu.memory_space<vmem>>, vector<2x96xf32>
    %c0_1 = arith.constant 0 : index
    %c0_2 = arith.constant 0 : index
    %1 = vector.load %arg2[%c0_1, %c0_2] : memref<1x96xf32, #tpu.memory_space<vmem>>, vector<1x96xf32>
    %c0_3 = arith.constant 0 : index
    %c0_4 = arith.constant 0 : index
    %2 = memref.load %arg3[%c0_3, %c0_4] : memref<1x1xf32, #tpu.memory_space<smem>>
    %3 = vector.broadcast %1 : vector<1x96xf32> to vector<2x96xf32>
    %4 = arith.mulf %0, %3 : vector<2x96xf32>
    %cst = arith.constant dense<0.000000e+00> : vector<2xf32>
    %5 = vector.multi_reduction <add>, %4, %cst [1] : vector<2x96xf32> to vector<2xf32>
    %6 = vector.shape_cast %5 : vector<2xf32> to vector<2x1xf32>
    %7 = vector.broadcast %2 : f32 to vector<2x1xf32>
    %8 = arith.addf %6, %7 : vector<2x1xf32>
    %9 = math.tanh %8 : vector<2x1xf32>
    %c0_5 = arith.constant 0 : index
    %c0_6 = arith.constant 0 : index
    %10 = vector.load %arg4[%c0_5, %c0_6] : memref<2x1xf32, #tpu.memory_space<vmem>>, vector<2x1xf32>
    tpu.vector_store %arg4[%c0_5, %c0_6], %9 {strides = array<i32>} : memref<2x1xf32, #tpu.memory_space<vmem>>, vector<2x1xf32>,
    return
  }
  func.func @transform_0(%arg0: i32) -> (i32, i32) {
    %c0_i32 = arith.constant 0 : i32
    %c0_i32_0 = arith.constant 0 : i32
    return %arg0, %c0_i32 : i32, i32
  }
  func.func @transform_1(%arg0: i32) -> (i32, i32) {
    %c0_i32 = arith.constant 0 : i32
    %c0_i32_0 = arith.constant 0 : i32
    %c0_i32_1 = arith.constant 0 : i32
    return %c0_i32, %c0_i32_0 : i32, i32
  }
  func.func @transform_2(%arg0: i32) -> (i32, i32) {
    %c0_i32 = arith.constant 0 : i32
    %c0_i32_0 = arith.constant 0 : i32
    %c0_i32_1 = arith.constant 0 : i32
    return %c0_i32, %c0_i32_0 : i32, i32
  }
  func.func @transform_3(%arg0: i32) -> (i32, i32) {
    %c0_i32 = arith.constant 0 : i32
    %c0_i32_0 = arith.constant 0 : i32
    return %arg0, %c0_i32 : i32, i32
  }
}

</mosaic_0001>

<llo_original>
// kernel: tpu_custom_call.1
$region0: #{tpu_custom_call.1}
  #allocation0 [shape = 'u32[]', space=smem, size = 0x4, offset = 0x4, fixed_abs, tag = 'smem constant byte address 0x4 - core index']
  #allocation1 [shape = 'u32[144,128]{1,0:T(1,128)}', space=vmem, size = 0x12000, scoped, tag = 'internal scratch']
  #allocation2 [shape = 'f32[1,1]{1,0:T(1,128)S(6)}', space=smem, size = 0x200, scoped, tag = 'scoped memory for tpu_custom_call.1']
  %s0 = inlined_call_operand.vmem [shape: f32[2,96], index: 0, kind: input, shape index: {}]
  %s1 = inlined_call_operand.vmem [shape: f32[1,96], index: 1, kind: input, shape index: {}]
  %s2 = inlined_call_operand.<no memory space> [shape: f32[1,1], index: 2, kind: input, shape index: {}]
  %s3 = inlined_call_operand.vmem [shape: f32[2,1], index: 3, kind: output, shape index: {}]
  %s4 = sld [smem:[#allocation0]]
  $region22: #{tpu_custom_call.1} parent=0
    _
  %s6 = ssub.s32 1, %s4
  %s7 = scalar_select 0, %s6, %s4
  %8 = sst [smem:[#allocation2]] %s2
  // Predicated region
  $region2: #{tpu_custom_call.1} parent=0 // pred_check
    _
  $region3: #{tpu_custom_call.1} parent=0 // pred_check_branch
    %10 = sbr.rel (0) target = $region5
  $region4: #{tpu_custom_call.1} parent=0 // pred_region
    _
  $region5: #{tpu_custom_call.1} parent=0 // pred_fallthru
    _
  // Predicated region
  $region6: #{tpu_custom_call.1} parent=0 // pred_check
    _
  $region7: #{tpu_custom_call.1} parent=0 // pred_check_branch
    %12 = sbr.rel (0) target = $region9
  $region8: #{tpu_custom_call.1} parent=0 // pred_region
    _
  $region9: #{tpu_custom_call.1} parent=0 // pred_fallthru
    _
  // Predicated region
  $region10: #{tpu_custom_call.1} parent=0 // pred_check
    _
  $region11: #{tpu_custom_call.1} parent=0 // pred_check_branch
    %14 = sbr.rel (0) target = $region13
  $region12: #{tpu_custom_call.1} parent=0 // pred_region
    _
  $region13: #{tpu_custom_call.1} parent=0 // pred_fallthru
    _
  %v15 = vld [vmem:[%s0] sm:$0x3]
  %v16 = vld [vmem:[%s1] sm:$0x1]
  %s17 = sld [smem:[#allocation2]]
  %v19 = vlaneseq
  %v20 = vshrl.u32 %v19, 7
  %v21 = vsub.s32 0, %v20
  %v22 = vrot.slane %v16, %v21
  %v24 = vmul.f32 %v15, %v22
  %vm25 = vcmask 779264
  %v26 = vsel %vm25, %v24, 0.0
  %27 = vadd.xlane.f32.xlu0 %v26
  %v28 = vpop.xlane.xlu0 %27
  %v29 = vstv %s17
  %v30 = vadd.f32 %v28, %v29
  %v31 = vtanh.pop %v30
  %vm32 = vcmask 1024
  %33 = vst.msk [vmem:[%s3] sm:$0x3] %vm32, %v31
  // Predicated region
  $region14: #{tpu_custom_call.1} parent=0 // pred_check
    _
  $region15: #{tpu_custom_call.1} parent=0 // pred_check_branch
    %35 = sbr.rel (0) target = $region17
  $region16: #{tpu_custom_call.1} parent=0 // pred_region
    _
  $region17: #{tpu_custom_call.1} parent=0 // pred_fallthru
    _
  // Predicated region
  $region18: #{tpu_custom_call.1} parent=0 // pred_check
    _
  $region19: #{tpu_custom_call.1} parent=0 // pred_check_branch
    %37 = sbr.rel (0) target = $region21
  $region20: #{tpu_custom_call.1} parent=0 // pred_region
    _
  $region21: #{tpu_custom_call.1} parent=0 // pred_fallthru
    _

</llo_original>
